<compile_context>
chip_gen: v6e
topology: v6e:2x2x1
jax: 0.10.0
libtpu: 0.0.40
codegen_flags: <defaults>
</compile_context>

<pallas_src>
import functools

import jax
import jax.numpy as jnp
from jax import lax
from jax.experimental import pallas as pl
from jax.experimental.pallas import tpu as pltpu

HP = 128   # padded hidden width  (lane-dense, multiple of 128)
OP = 128   # padded obs/output width (lane-dense, multiple of 128)

_VMEM = pl.BlockSpec(memory_space=pltpu.MemorySpace.VMEM)
_SMEM = pl.BlockSpec(memory_space=pltpu.MemorySpace.SMEM)


# ---------------------------------------------------------------------------
# kernels
# ---------------------------------------------------------------------------
def odefunc_eval_kernel(obs_dim, mxu_dtype, t_ref, z_ref, w1t_ref, w1z_ref,
                        b1_ref, w15_ref, b15_ref, w2_ref, b2_ref, out_ref):
    """Single f(t, z) evaluation (== the PyTorch module forward).

    fc1's tiny K=obs_dim+1 contraction runs as VPU FMAs; the two nhidden-wide
    matmuls run on the MXU in `mxu_dtype` with f32 accumulation.
    """
    t = t_ref[0]                                     # scalar time from SMEM
    z = z_ref[...]                                   # (B, OP), padded lanes = 0

    h = t * w1t_ref[...] + b1_ref[...]               # (1,HP) -> broadcast
    for d in range(obs_dim):                         # unrolled K=obs_dim FMAs
        h = h + z[:, d:d + 1] * w1z_ref[d:d + 1, :]
    h = jnp.tanh(h)

    w15 = w15_ref[...].astype(mxu_dtype)
    w2 = w2_ref[...].astype(mxu_dtype)
    h = jnp.tanh(jnp.dot(h.astype(mxu_dtype), w15,
                         preferred_element_type=jnp.float32) + b15_ref[...])
    out = jnp.dot(h.astype(mxu_dtype), w2,
                  preferred_element_type=jnp.float32) + b2_ref[...]
    out_ref[...] = out.astype(out_ref.dtype)


def odefunc_euler_kernel(obs_dim, n_steps, unroll, mxu_dtype, tparams_ref,
                         z0_ref, w1t_ref, w1z_ref, b1_ref, w15_ref, b15_ref,
                         w2_ref, b2_ref, out_ref):
    """n_steps forward-Euler steps fused into one kernel invocation.

    Weights stay resident in VMEM; the state (and running t*W1_t term) is
    carried in vregs by the fori_loop; dt is folded into fc2 once.
    """
    B = z0_ref.shape[0]                              # batch block rows
    t0 = tparams_ref[0]
    dt = tparams_ref[1]

    # ---- loop-invariant hoists (one-time cost amortized over n_steps) ------
    w1t_b = jnp.broadcast_to(w1t_ref[...], (B, HP))
    b1_b = jnp.broadcast_to(b1_ref[...], (B, HP))
    b15_b = jnp.broadcast_to(b15_ref[...], (B, HP))
    b2dt_b = dt * jnp.broadcast_to(b2_ref[...], (B, OP))     # dt folded in
    w15 = w15_ref[...].astype(mxu_dtype)
    w2dt = (dt * w2_ref[...]).astype(mxu_dtype)              # dt folded in
    w1z_rows = [w1z_ref[d:d + 1, :] for d in range(obs_dim)]
    dtw = dt * w1t_b                                         # per-step t incr.
    tw0 = t0 * w1t_b + b1_b                                  # t*W1_t + b1 @ k=0

    def step(_, carry):
        z, tw = carry                                # both live in vregs
        h = tw
        for d in range(obs_dim):                     # K=obs_dim VPU FMAs
            h = h + z[:, d:d + 1] * w1z_rows[d]
        h = jnp.tanh(h)
        h = jnp.tanh(jnp.dot(h.astype(mxu_dtype), w15,
                             preferred_element_type=jnp.float32) + b15_b)
        z = z + jnp.dot(h.astype(mxu_dtype), w2dt,
                        preferred_element_type=jnp.float32) + b2dt_b
        return z, tw + dtw                           # padded lanes stay 0

    z_final, _ = lax.fori_loop(0, n_steps, step, (z0_ref[...], tw0),
                               unroll=unroll)
    out_ref[...] = z_final.astype(out_ref.dtype)


# ---------------------------------------------------------------------------
# wrappers
# ---------------------------------------------------------------------------
def _pad_z(z, rows=None):
    B, obs_dim = z.shape
    rows = B if rows is None else rows
    return jnp.zeros((rows, OP), jnp.float32).at[:B, :obs_dim].set(z)


def odefunc_forward(t, z, params, mxu_dtype=jnp.bfloat16):
    """One evaluation of the ODE function: matches PyTorch OdeFunc.forward."""
    B, obs_dim = z.shape
    t_arr = jnp.asarray(t, jnp.float32).reshape(1)
    out_p = pl.pallas_call(
        functools.partial(odefunc_eval_kernel, obs_dim, mxu_dtype),
        out_shape=jax.ShapeDtypeStruct((B, OP), jnp.float32),
        in_specs=[_SMEM,                 # t
                  _VMEM,                 # z (B, OP)
                  _VMEM, _VMEM, _VMEM,   # w1t, w1z, b1
                  _VMEM, _VMEM,          # w15, b15
                  _VMEM, _VMEM],         # w2, b2
        out_specs=_VMEM,
    )(t_arr, _pad_z(z),
      params["w1t"], params["w1z"], params["b1"],
      params["w15"], params["b15"], params["w2"], params["b2"])
    return out_p[:, :obs_dim]


def odefunc_integrate_euler(t0, dt, n_steps, z0, params,
                            mxu_dtype=jnp.bfloat16, unroll=4,
                            batch_block=None):
    """Fused forward-Euler integration: n_steps f-evals in ONE pallas_call,
    with a parallel batch grid (shards across TensorCores on v7x and keeps the
    per-block VMEM footprint bounded on v6e/v7x at large B)."""
    B, obs_dim = z0.shape
    if batch_block is None:
        batch_block = min(512, max(8, -(-B // 8) * 8))
    blk = -(-int(batch_block) // 8) * 8              # multiple of 8 sublanes
    Bp = -(-B // blk) * blk                          # padded batch
    grid = (Bp // blk,)

    tparams = jnp.array([t0, dt], dtype=jnp.float32)
    z0_p = _pad_z(z0, rows=Bp)

    const = lambda shape: pl.BlockSpec(shape, lambda i: (0, 0))   # resident
    out_p = pl.pallas_call(
        functools.partial(odefunc_euler_kernel, obs_dim, n_steps, unroll,
                          mxu_dtype),
        out_shape=jax.ShapeDtypeStruct((Bp, OP), jnp.float32),
        grid=grid,
        in_specs=[_SMEM,                                        # [t0, dt]
                  pl.BlockSpec((blk, OP), lambda i: (i, 0)),    # z0 block
                  const((1, HP)),                               # w1t
                  const((obs_dim, HP)),                         # w1z
                  const((1, HP)),                               # b1
                  const((HP, HP)),                              # w15
                  const((1, HP)),                               # b15
                  const((HP, OP)),                              # w2
                  const((1, OP))],                              # b2
        out_specs=pl.BlockSpec((blk, OP), lambda i: (i, 0)),
        compiler_params=pltpu.CompilerParams(
            dimension_semantics=("parallel",)),
    )(tparams, z0_p,
      params["w1t"], params["w1z"], params["b1"],
      params["w15"], params["b15"], params["w2"], params["b2"])
    return out_p[:B, :obs_dim]


# ---------------------------------------------------------------------------
# parameters & pure-JAX references
# ---------------------------------------------------------------------------
def _pad2(x, rows, cols):
    out = jnp.zeros((rows, cols), jnp.float32)
    return out.at[:x.shape[0], :x.shape[1]].set(x)


def init_params(key, obs_dim=2, nhidden=50, time_dependent=True):
    """nn.Linear-style U(-1/sqrt(fan_in), 1/sqrt(fan_in)) init.

    Returns (padded params for the kernel, raw params for the reference).
    Weights stored as (in_features, out_features); padding is zero so padded
    lanes never contribute to the logical result.
    """
    in1 = obs_dim + 1 if time_dependent else obs_dim
    k = jax.random.split(key, 6)

    def lin(kw, kb, fan_in, fan_out):
        bound = 1.0 / jnp.sqrt(jnp.float32(fan_in))
        w = jax.random.uniform(kw, (fan_in, fan_out), jnp.float32, -bound, bound)
        b = jax.random.uniform(kb, (1, fan_out), jnp.float32, -bound, bound)
        return w, b

    w1, b1 = lin(k[0], k[1], in1, nhidden)            # (obs_dim+1, nhidden)
    w15, b15 = lin(k[2], k[3], nhidden, nhidden)
    w2, b2 = lin(k[4], k[5], nhidden, obs_dim)

    raw = {"w1t": w1[:1, :], "w1z": w1[1:, :], "b1": b1,
           "w15": w15, "b15": b15, "w2": w2, "b2": b2}

    padded = {
        "w1t": _pad2(raw["w1t"], 1, HP),
        "w1z": _pad2(raw["w1z"], obs_dim, HP),
        "b1": _pad2(raw["b1"], 1, HP),
        "w15": _pad2(raw["w15"], HP, HP),
        "b15": _pad2(raw["b15"], 1, HP),
        "w2": _pad2(raw["w2"], HP, OP),
        "b2": _pad2(raw["b2"], 1, OP),
    }
    return padded, raw


def reference_forward(t, z, raw):
    """Pure-JAX reference identical to the PyTorch forward."""
    B = z.shape[0]
    t_vec = jnp.ones((B, 1), jnp.float32) * t
    w1 = jnp.concatenate([raw["w1t"], raw["w1z"]], axis=0)
    x = jnp.concatenate([t_vec, z], axis=1)
    h = jnp.tanh(x @ w1 + raw["b1"])
    h = jnp.tanh(h @ raw["w15"] + raw["b15"])
    return h @ raw["w2"] + raw["b2"]


def reference_integrate_euler(t0, dt, n_steps, z0, raw):
    def body(k, z):
        t = jnp.float32(t0) + jnp.float32(dt) * k
        return z + jnp.float32(dt) * reference_forward(t, z, raw)
    return lax.fori_loop(0, n_steps, body, z0)


# ---------------------------------------------------------------------------
if __name__ == "__main__":
    key = jax.random.PRNGKey(0)
    kp, kz, kz2 = jax.random.split(key, 3)

    obs_dim, nhidden, B = 2, 50, 8
    params, raw = init_params(kp, obs_dim=obs_dim, nhidden=nhidden,
                              time_dependent=True)
    z = jax.random.normal(kz, (B, obs_dim), dtype=jnp.float32)
    t = jnp.float32(0.5)

    # 1) single evaluation, f32 MXU path -> tight match to the module forward
    ref = reference_forward(t, z, raw)
    out_f32 = jax.block_until_ready(
        odefunc_forward(t, z, params, mxu_dtype=jnp.float32))
    assert out_f32.shape == (B, obs_dim)
    assert jnp.allclose(out_f32, ref, atol=1e-5, rtol=1e-5), \
        "f32 eval mismatch vs reference"

    # 2) single evaluation, bf16 MXU path (default perf path)
    out_bf16 = jax.block_until_ready(odefunc_forward(t, z, params))
    assert jnp.allclose(out_bf16, ref, atol=3e-2, rtol=3e-2), \
        "bf16 eval mismatch vs reference"

    # 3) fused 64-step Euler integration, f32 MXU path -> tight match
    t0, dt, n_steps = 0.0, 0.01, 64
    zT_ref = reference_integrate_euler(t0, dt, n_steps, z, raw)
    zT_f32 = jax.block_until_ready(
        odefunc_integrate_euler(t0, dt, n_steps, z, params,
                                mxu_dtype=jnp.float32))
    assert zT_f32.shape == (B, obs_dim)
    assert jnp.allclose(zT_f32, zT_ref, atol=1e-4, rtol=1e-3), \
        "f32 euler mismatch vs reference"

    # 4) fused Euler, bf16 MXU (default), batch grid with Bp padding (B=20,
    #    blk=8 -> grid=(3,)).  bf16 rounding compounds over 64 steps, so the
    #    tolerance is looser here.
    B2 = 20
    z2 = jax.random.normal(kz2, (B2, obs_dim), dtype=jnp.float32)
    zT2 = jax.block_until_ready(
        odefunc_integrate_euler(t0, dt, n_steps, z2, params, batch_block=8))
    zT2_ref = reference_integrate_euler(t0, dt, n_steps, z2, raw)
    assert zT2.shape == (B2, obs_dim)
    assert jnp.allclose(zT2, zT2_ref, atol=5e-2, rtol=5e-2), \
        "bf16 euler mismatch vs reference"

    print("KERNEL_OK")
</pallas_src>

<mosaic_0001>
module attributes {stable_mosaic.version = 11 : i64} {
  func.func @odefunc_eval_kernel(%arg0: memref<1xf32, #tpu.memory_space<smem>>, %arg1: memref<8x128xf32, #tpu.memory_space<vmem>>, %arg2: memref<1x128xf32, #tpu.memory_space<vmem>>, %arg3: memref<2x128xf32, #tpu.memory_space<vmem>>, %arg4: memref<1x128xf32, #tpu.memory_space<vmem>>, %arg5: memref<128x128xf32, #tpu.memory_space<vmem>>, %arg6: memref<1x128xf32, #tpu.memory_space<vmem>>, %arg7: memref<128x128xf32, #tpu.memory_space<vmem>>, %arg8: memref<1x128xf32, #tpu.memory_space<vmem>>, %arg9: memref<8x128xf32, #tpu.memory_space<vmem>>) attributes {dimension_semantics = [], scalar_prefetch = 0 : i64, scratch_operands = 0 : i64, tpu.core_type = #tpu.core_type<tc>} {
    %c0 = arith.constant 0 : index
    %0 = memref.load %arg0[%c0] : memref<1xf32, #tpu.memory_space<smem>>
    %c0_0 = arith.constant 0 : index
    %c0_1 = arith.constant 0 : index
    %1 = vector.load %arg1[%c0_0, %c0_1] : memref<8x128xf32, #tpu.memory_space<vmem>>, vector<8x128xf32>
    %c0_2 = arith.constant 0 : index
    %c0_3 = arith.constant 0 : index
    %2 = vector.load %arg2[%c0_2, %c0_3] : memref<1x128xf32, #tpu.memory_space<vmem>>, vector<1x128xf32>
    %3 = vector.broadcast %0 : f32 to vector<1x128xf32>
    %4 = arith.mulf %3, %2 : vector<1x128xf32>
    %c0_4 = arith.constant 0 : index
    %c0_5 = arith.constant 0 : index
    %5 = vector.load %arg4[%c0_4, %c0_5] : memref<1x128xf32, #tpu.memory_space<vmem>>, vector<1x128xf32>
    %6 = arith.addf %4, %5 : vector<1x128xf32>
    %7 = vector.extract_strided_slice %1 {offsets = [0, 0], sizes = [8, 1], strides = [1, 1]} : vector<8x128xf32> to vector<8x1xf32>
    %c0_6 = arith.constant 0 : index
    %c0_7 = arith.constant 0 : index
    %8 = vector.load %arg3[%c0_6, %c0_7] : memref<2x128xf32, #tpu.memory_space<vmem>>, vector<1x128xf32>
    %9 = vector.broadcast %7 : vector<8x1xf32> to vector<8x128xf32>
    %10 = vector.broadcast %8 : vector<1x128xf32> to vector<8x128xf32>
    %11 = arith.mulf %9, %10 : vector<8x128xf32>
    %12 = vector.broadcast %6 : vector<1x128xf32> to vector<8x128xf32>
    %13 = arith.addf %12, %11 : vector<8x128xf32>
    %14 = vector.extract_strided_slice %1 {offsets = [0, 1], sizes = [8, 1], strides = [1, 1]} : vector<8x128xf32> to vector<8x1xf32>
    %c1 = arith.constant 1 : index
    %c0_8 = arith.constant 0 : index
    %15 = vector.load %arg3[%c1, %c0_8] : memref<2x128xf32, #tpu.memory_space<vmem>>, vector<1x128xf32>
    %16 = vector.broadcast %14 : vector<8x1xf32> to vector<8x128xf32>
    %17 = vector.broadcast %15 : vector<1x128xf32> to vector<8x128xf32>
    %18 = arith.mulf %16, %17 : vector<8x128xf32>
    %19 = arith.addf %13, %18 : vector<8x128xf32>
    %20 = math.tanh %19 : vector<8x128xf32>
    %c0_9 = arith.constant 0 : index
    %c0_10 = arith.constant 0 : index
    %21 = vector.load %arg5[%c0_9, %c0_10] : memref<128x128xf32, #tpu.memory_space<vmem>>, vector<128x128xf32>
    %c0_11 = arith.constant 0 : index
    %c0_12 = arith.constant 0 : index
    %22 = vector.load %arg7[%c0_11, %c0_12] : memref<128x128xf32, #tpu.memory_space<vmem>>, vector<128x128xf32>
    %cst = arith.constant dense<0.000000e+00> : vector<8x128xf32>
    %23 = tpu.matmul %20, %21, %cst {dimension_numbers = #tpu.dot_dimension_numbers<[1], [0], [0], [1], [0, 0, 1, 1], [], []>} : vector<8x128xf32>, vector<128x128xf32>, vector<8x128xf32> -> vector<8x128xf32>
    %c0_13 = arith.constant 0 : index
    %c0_14 = arith.constant 0 : index
    %24 = vector.load %arg6[%c0_13, %c0_14] : memref<1x128xf32, #tpu.memory_space<vmem>>, vector<1x128xf32>
    %25 = vector.broadcast %24 : vector<1x128xf32> to vector<8x128xf32>
    %26 = arith.addf %23, %25 : vector<8x128xf32>
    %27 = math.tanh %26 : vector<8x128xf32>
    %cst_15 = arith.constant dense<0.000000e+00> : vector<8x128xf32>
    %28 = tpu.matmul %27, %22, %cst_15 {dimension_numbers = #tpu.dot_dimension_numbers<[1], [0], [0], [1], [0, 0, 1, 1], [], []>} : vector<8x128xf32>, vector<128x128xf32>, vector<8x128xf32> -> vector<8x128xf32>
    %c0_16 = arith.constant 0 : index
    %c0_17 = arith.constant 0 : index
    %29 = vector.load %arg8[%c0_16, %c0_17] : memref<1x128xf32, #tpu.memory_space<vmem>>, vector<1x128xf32>
    %30 = vector.broadcast %29 : vector<1x128xf32> to vector<8x128xf32>
    %31 = arith.addf %28, %30 : vector<8x128xf32>
    %c0_18 = arith.constant 0 : index
    %c0_19 = arith.constant 0 : index
    %32 = vector.load %arg9[%c0_18, %c0_19] : memref<8x128xf32, #tpu.memory_space<vmem>>, vector<8x128xf32>
    tpu.vector_store %arg9[%c0_18, %c0_19], %31 {strides = array<i32>} : memref<8x128xf32, #tpu.memory_space<vmem>>, vector<8x128xf32>,
    return
  }
}

</mosaic_0001>

<llo_original>
// kernel: tpu_custom_call.1
$region0: #{tpu_custom_call.1}
  #allocation0 [shape = 'u32[]', space=smem, size = 0x4, offset = 0x4, fixed_abs, tag = 'smem constant byte address 0x4 - core index']
  #allocation1 [shape = 'u32[144,128]{1,0:T(1,128)}', space=vmem, size = 0x12000, scoped, tag = 'internal scratch']
  #allocation2 [shape = 'f32[1]{0:T(128)S(6)}', space=smem, size = 0x200, scoped, tag = 'scoped memory for tpu_custom_call.1']
  %s0 = inlined_call_operand.<no memory space> [shape: f32[1], index: 0, kind: input, shape index: {}]
  %s1 = inlined_call_operand.hbm [shape: f32[8,128], index: 1, kind: input, shape index: {}]
  %s2 = inlined_call_operand.vmem [shape: f32[1,128], index: 2, kind: input, shape index: {}]
  %s3 = inlined_call_operand.vmem [shape: f32[2,128], index: 3, kind: input, shape index: {}]
  %s4 = inlined_call_operand.vmem [shape: f32[1,128], index: 4, kind: input, shape index: {}]
  %s5 = inlined_call_operand.hbm [shape: f32[128,128], index: 5, kind: input, shape index: {}]
  %s6 = inlined_call_operand.vmem [shape: f32[1,128], index: 6, kind: input, shape index: {}]
  %s7 = inlined_call_operand.hbm [shape: f32[128,128], index: 7, kind: input, shape index: {}]
  %s8 = inlined_call_operand.vmem [shape: f32[1,128], index: 8, kind: input, shape index: {}]
  %s9 = inlined_call_operand.hbm [shape: f32[8,128], index: 9, kind: output, shape index: {}]
  %s10 = sld [smem:[#allocation0]]
  $region58: #{tpu_custom_call.1} parent=0
    _
  %s12 = ssub.s32 1, %s10
  %s13 = scalar_select 0, %s12, %s10
  %14 = sst [smem:[#allocation2]] %s0
  $region1: #{tpu_custom_call.1} parent=0
    #allocation3 [shape = 'u8[4096]{0}', space=vmem, size = 0x1000, scoped, tag = 'input window, operand 1, single buffered']
    #allocation4 [shape = 's32[1]{0}', space=sflag, size = 0x4, scoped, tag = 'scoped memory for tpu_custom_call.1']
    #allocation5 [shape = 's32[1]{0}', space=sflag, size = 0x4, scoped, tag = 'scoped memory for tpu_custom_call.1']
    #allocation6 [shape = 'u8[65536]{0}', space=vmem, size = 0x10000, scoped, tag = 'input window, operand 5, single buffered']
    #allocation7 [shape = 's32[1]{0}', space=sflag, size = 0x4, scoped, tag = 'scoped memory for tpu_custom_call.1']
    #allocation8 [shape = 'u8[65536]{0}', space=vmem, size = 0x10000, scoped, tag = 'input window, operand 7, single buffered']
    #allocation9 [shape = 'u8[4096]{0}', space=vmem, size = 0x1000, scoped, tag = 'output window, operand 0, single buffered']
    %15 = vsyncpa [#allocation4], 0
    %16 = vsyncpa [#allocation7], 0
    %17 = vsyncpa [#allocation5], 0
    // Predicated region
    $region2: #{tpu_custom_call.1} parent=1 // pred_check
      _
    $region3: #{tpu_custom_call.1} parent=1 // pred_check_branch
      %19 = sbr.rel (0) target = $region5
    $region4: #{tpu_custom_call.1} parent=1 // pred_region
      _
    $region5: #{tpu_custom_call.1} parent=1 // pred_fallthru
      _
    // Predicated region
    $region6: #{tpu_custom_call.1} parent=1 // pred_check
      _
    $region7: #{tpu_custom_call.1} parent=1 // pred_check_branch
      %21 = sbr.rel (0) target = $region9
    $region8: #{tpu_custom_call.1} parent=1 // pred_region
      %s23 = ssub.s32 128, 128
      %24 = vsyncadd [#allocation4], %s23
      %s26 = sshll.u32 [#allocation3], 4
      %s27 = int_to_ptr.vmem [resolvable:$true] %s26
      %29 = dma.hbm_to_vmem [thread:$0]  %s1, 128, %s27, [#allocation4]
    $region9: #{tpu_custom_call.1} parent=1 // pred_fallthru
      _
    // Predicated region
    $region10: #{tpu_custom_call.1} parent=1 // pred_check
      _
    $region11: #{tpu_custom_call.1} parent=1 // pred_check_branch
      %31 = sbr.rel (0) target = $region13
    $region12: #{tpu_custom_call.1} parent=1 // pred_region
      _
    $region13: #{tpu_custom_call.1} parent=1 // pred_fallthru
      _
    // Predicated region
    $region14: #{tpu_custom_call.1} parent=1 // pred_check
      _
    $region15: #{tpu_custom_call.1} parent=1 // pred_check_branch
      %33 = sbr.rel (0) target = $region17
    $region16: #{tpu_custom_call.1} parent=1 // pred_region
      _
    $region17: #{tpu_custom_call.1} parent=1 // pred_fallthru
      _
    // Predicated region
    $region18: #{tpu_custom_call.1} parent=1 // pred_check
      _
    $region19: #{tpu_custom_call.1} parent=1 // pred_check_branch
      %35 = sbr.rel (0) target = $region21
    $region20: #{tpu_custom_call.1} parent=1 // pred_region
      _
    $region21: #{tpu_custom_call.1} parent=1 // pred_fallthru
      _
    // Predicated region
    $region22: #{tpu_custom_call.1} parent=1 // pred_check
      _
    $region23: #{tpu_custom_call.1} parent=1 // pred_check_branch
      %37 = sbr.rel (0) target = $region25
    $region24: #{tpu_custom_call.1} parent=1 // pred_region
      %s39 = ssub.s32 2048, 2048
      %40 = vsyncadd [#allocation7], %s39
      %s41 = sshll.u32 [#allocation6], 4
      %s42 = int_to_ptr.vmem [resolvable:$true] %s41
      %47 = dma.hbm_to_vmem [thread:$0]  %s5, 2048, %s42, [#allocation7], 128, 128, 8
    $region25: #{tpu_custom_call.1} parent=1 // pred_fallthru
      _
    // Predicated region
    $region26: #{tpu_custom_call.1} parent=1 // pred_check
      _
    $region27: #{tpu_custom_call.1} parent=1 // pred_check_branch
      %49 = sbr.rel (0) target = $region29
    $region28: #{tpu_custom_call.1} parent=1 // pred_region
      _
    $region29: #{tpu_custom_call.1} parent=1 // pred_fallthru
      _
    // Predicated region
    $region30: #{tpu_custom_call.1} parent=1 // pred_check
      _
    $region31: #{tpu_custom_call.1} parent=1 // pred_check_branch
      %51 = sbr.rel (0) target = $region33
    $region32: #{tpu_custom_call.1} parent=1 // pred_region
      %s53 = ssub.s32 2048, 2048
      %54 = vsyncadd [#allocation7], %s53
      %s55 = sshll.u32 [#allocation8], 4
      %s56 = int_to_ptr.vmem [resolvable:$true] %s55
      %61 = dma.hbm_to_vmem [thread:$0]  %s7, 2048, %s56, [#allocation7], 128, 128, 8
    $region33: #{tpu_custom_call.1} parent=1 // pred_fallthru
      _
    // Predicated region
    $region34: #{tpu_custom_call.1} parent=1 // pred_check
      _
    $region35: #{tpu_custom_call.1} parent=1 // pred_check_branch
      %63 = sbr.rel (0) target = $region37
    $region36: #{tpu_custom_call.1} parent=1 // pred_region
      _
    $region37: #{tpu_custom_call.1} parent=1 // pred_fallthru
      _
    // Predicated region
    $region38: #{tpu_custom_call.1} parent=1 // pred_check
      _
    $region39: #{tpu_custom_call.1} parent=1 // pred_check_branch
      %65 = sbr.rel (0) target = $region41
    $region40: #{tpu_custom_call.1} parent=1 // pred_region
      %66 = dma.done [#allocation4], 128
    $region41: #{tpu_custom_call.1} parent=1 // pred_fallthru
      _
    // Predicated region
    $region42: #{tpu_custom_call.1} parent=1 // pred_check
      _
    $region43: #{tpu_custom_call.1} parent=1 // pred_check_branch
      %68 = sbr.rel (0) target = $region45
    $region44: #{tpu_custom_call.1} parent=1 // pred_region
      %69 = dma.done [#allocation7], 2048
    $region45: #{tpu_custom_call.1} parent=1 // pred_fallthru
      _
    // Predicated region
    $region46: #{tpu_custom_call.1} parent=1 // pred_check
      _
    $region47: #{tpu_custom_call.1} parent=1 // pred_check_branch
      %71 = sbr.rel (0) target = $region49
    $region48: #{tpu_custom_call.1} parent=1 // pred_region
      %72 = dma.done [#allocation7], 2048
    $region49: #{tpu_custom_call.1} parent=1 // pred_fallthru
      _
    %s73 = sld [smem:[#allocation2]]
    %v74 = vld [vmem:[#allocation3] sm:$0xff]
    %v75 = vld [vmem:[%s2] sm:$0x1]
    %v76 = vstv %s73
    %v77 = vmul.f32 %v76, %v75
    %v78 = vld [vmem:[%s4] sm:$0x1]
    %v79 = vadd.f32 %v77, %v78
    %v80 = vld [vmem:[%s3] sm:$0x1]
    %82 = vset.pattern.permute.xlu0 0
    %83 = vperm.xlu0 %82, %v74
    %v84 = vpop.permute.xlu0 %83
    %v86 = vlaneseq
    %v87 = vshrl.u32 %v86, 7
    %v88 = vsub.s32 0, %v87
    %v89 = vrot.slane %v80, %v88
    %v90 = vmul.f32 %v84, %v89
    %v92 = vlaneseq
    %v93 = vshrl.u32 %v92, 7
    %v94 = vsub.s32 0, %v93
    %v95 = vrot.slane %v79, %v94
    %v97 = vadd.f32 %v95, %v90
    %v98 = vld [vmem:[%s3 + $0x1] sm:$0x1]
    %99 = vset.pattern.permute.xlu0 1
    %100 = vperm.xlu0 %99, %v74
    %v101 = vpop.permute.xlu0 %100
    %v103 = vlaneseq
    %v104 = vshrl.u32 %v103, 7
    %v105 = vsub.s32 0, %v104
    %v106 = vrot.slane %v98, %v105
    %v107 = vmul.f32 %v101, %v106
    %v108 = vadd.f32 %v97, %v107
    %v109 = vtanh.pop %v108
    %v110 = vld [vmem:[#allocation6] sm:$0xff]
    %v111 = vld [vmem:[#allocation6 + $0x8] sm:$0xff]
    %v112 = vld [vmem:[#allocation6 + $0x10] sm:$0xff]
    %v113 = vld [vmem:[#allocation6 + $0x18] sm:$0xff]
    %v114 = vld [vmem:[#allocation6 + $0x20] sm:$0xff]
    %v115 = vld [vmem:[#allocation6 + $0x28] sm:$0xff]
    %v116 = vld [vmem:[#allocation6 + $0x30] sm:$0xff]
    %v117 = vld [vmem:[#allocation6 + $0x38] sm:$0xff]
    %v118 = vld [vmem:[#allocation6 + $0x40] sm:$0xff]
    %v119 = vld [vmem:[#allocation6 + $0x48] sm:$0xff]
    %v120 = vld [vmem:[#allocation6 + $0x50] sm:$0xff]
    %v121 = vld [vmem:[#allocation6 + $0x58] sm:$0xff]
    %v122 = vld [vmem:[#allocation6 + $0x60] sm:$0xff]
    %v123 = vld [vmem:[#allocation6 + $0x68] sm:$0xff]
    %v124 = vld [vmem:[#allocation6 + $0x70] sm:$0xff]
    %v125 = vld [vmem:[#allocation6 + $0x78] sm:$0xff]
    %v126 = vld [vmem:[#allocation8] sm:$0xff]
    %v127 = vld [vmem:[#allocation8 + $0x8] sm:$0xff]
    %v128 = vld [vmem:[#allocation8 + $0x10] sm:$0xff]
    %v129 = vld [vmem:[#allocation8 + $0x18] sm:$0xff]
    %v130 = vld [vmem:[#allocation8 + $0x20] sm:$0xff]
    %v131 = vld [vmem:[#allocation8 + $0x28] sm:$0xff]
    %v132 = vld [vmem:[#allocation8 + $0x30] sm:$0xff]
    %v133 = vld [vmem:[#allocation8 + $0x38] sm:$0xff]
    %v134 = vld [vmem:[#allocation8 + $0x40] sm:$0xff]
    %v135 = vld [vmem:[#allocation8 + $0x48] sm:$0xff]
    %v136 = vld [vmem:[#allocation8 + $0x50] sm:$0xff]
    %v137 = vld [vmem:[#allocation8 + $0x58] sm:$0xff]
    %v138 = vld [vmem:[#allocation8 + $0x60] sm:$0xff]
    %v139 = vld [vmem:[#allocation8 + $0x68] sm:$0xff]
    %v140 = vld [vmem:[#allocation8 + $0x70] sm:$0xff]
    %v141 = vld [vmem:[#allocation8 + $0x78] sm:$0xff]
    %v142 = vld [vmem:[%s6] sm:$0x1]
    %v144 = vlaneseq
    %v145 = vshrl.u32 %v144, 7
    %v146 = vsub.s32 0, %v145
    %v147 = vrot.slane %v142, %v146
    %149 = vmatprep.subr.mxu0 0.0
    %150 = vmatpush1.msra.mxu0 %v125
    %151 = vmatprep.subr.mxu0 0.0
    %152 = vmatpush1.msra.mxu0 %v124
    %153 = vmatprep.subr.mxu0 0.0
    %154 = vmatpush1.msra.mxu0 %v123
    %155 = vmatprep.subr.mxu0 0.0
    %156 = vmatpush1.msra.mxu0 %v122
    %157 = vmatprep.subr.mxu0 0.0
    %158 = vmatpush1.msra.mxu0 %v121
    %159 = vmatprep.subr.mxu0 0.0
    %160 = vmatpush1.msra.mxu0 %v120
    %161 = vmatprep.subr.mxu0 0.0
    %162 = vmatpush1.msra.mxu0 %v119
    %163 = vmatprep.subr.mxu0 0.0
    %164 = vmatpush1.msra.mxu0 %v118
    %165 = vmatprep.subr.mxu0 0.0
    %166 = vmatpush1.msra.mxu0 %v117
    %167 = vmatprep.subr.mxu0 0.0
    %168 = vmatpush1.msra.mxu0 %v116
    %169 = vmatprep.subr.mxu0 0.0
    %170 = vmatpush1.msra.mxu0 %v115
    %171 = vmatprep.subr.mxu0 0.0
    %172 = vmatpush1.msra.mxu0 %v114
    %173 = vmatprep.subr.mxu0 0.0
    %174 = vmatpush1.msra.mxu0 %v113
    %175 = vmatprep.subr.mxu0 0.0
    %176 = vmatpush1.msra.mxu0 %v112
    %177 = vmatprep.subr.mxu0 0.0
    %178 = vmatpush1.msra.mxu0 %v111
    %179 = vmatprep.subr.mxu0 0.0
    %180 = vmatpush1.msra.mxu0 %v110
    %181 = vmatprep.subr.mxu0 0.0
    %182 = vmatpush2.msra.mxu0 0.0
    %183 = vmatprep.subr.mxu0 0.0
    %184 = vmatpush2.msra.mxu0 0.0
    %185 = vmatprep.subr.mxu0 0.0
    %186 = vmatpush2.msra.mxu0 0.0
    %187 = vmatprep.subr.mxu0 0.0
    %188 = vmatpush2.msra.mxu0 0.0
    %189 = vmatprep.subr.mxu0 0.0
    %190 = vmatpush2.msra.mxu0 0.0
    %191 = vmatprep.subr.mxu0 0.0
    %192 = vmatpush2.msra.mxu0 0.0
    %193 = vmatprep.subr.mxu0 0.0
    %194 = vmatpush2.msra.mxu0 0.0
    %195 = vmatprep.subr.mxu0 0.0
    %196 = vmatpush2.msra.mxu0 0.0
    %197 = vmatprep.subr.mxu0 0.0
    %198 = vmatpush2.msra.mxu0 0.0
    %199 = vmatprep.subr.mxu0 0.0
    %200 = vmatpush2.msra.mxu0 0.0
    %201 = vmatprep.subr.mxu0 0.0
    %202 = vmatpush2.msra.mxu0 0.0
    %203 = vmatprep.subr.mxu0 0.0
    %204 = vmatpush2.msra.mxu0 0.0
    %205 = vmatprep.subr.mxu0 0.0
    %206 = vmatpush2.msra.mxu0 0.0
    %207 = vmatprep.subr.mxu0 0.0
    %208 = vmatpush2.msra.mxu0 0.0
    %209 = vmatprep.subr.mxu0 0.0
    %210 = vmatpush2.msra.mxu0 0.0
    %211 = vmatprep.subr.mxu0 0.0
    %212 = vmatpush2.msra.mxu0 0.0
    %213 = vmatprep.mubr.f32.mxu0 0.0
    %214 = vmatmul.mubr.f32.gmra.mxu0 %v109
    %v215 = vpop.f32.mrf.mxu0
    %v216 = vadd.f32 %v147, %v215
    %v217 = vpop.f32.mrf.mxu0
    %218 = vdwg.mxu0
    %v219 = vtanh.pop %v216
    %v220 = vld [vmem:[%s8] sm:$0x1]
    %v222 = vlaneseq
    %v223 = vshrl.u32 %v222, 7
    %v224 = vsub.s32 0, %v223
    %v225 = vrot.slane %v220, %v224
    %227 = vmatprep.subr.mxu0 0.0
    %228 = vmatpush1.msra.mxu0 %v141
    %229 = vmatprep.subr.mxu0 0.0
    %230 = vmatpush1.msra.mxu0 %v140
    %231 = vmatprep.subr.mxu0 0.0
    %232 = vmatpush1.msra.mxu0 %v139
    %233 = vmatprep.subr.mxu0 0.0
    %234 = vmatpush1.msra.mxu0 %v138
    %235 = vmatprep.subr.mxu0 0.0
    %236 = vmatpush1.msra.mxu0 %v137
    %237 = vmatprep.subr.mxu0 0.0
    %238 = vmatpush1.msra.mxu0 %v136
    %239 = vmatprep.subr.mxu0 0.0
    %240 = vmatpush1.msra.mxu0 %v135
    %241 = vmatprep.subr.mxu0 0.0
    %242 = vmatpush1.msra.mxu0 %v134
    %243 = vmatprep.subr.mxu0 0.0
    %244 = vmatpush1.msra.mxu0 %v133
    %245 = vmatprep.subr.mxu0 0.0
    %246 = vmatpush1.msra.mxu0 %v132
    %247 = vmatprep.subr.mxu0 0.0
    %248 = vmatpush1.msra.mxu0 %v131
    %249 = vmatprep.subr.mxu0 0.0
    %250 = vmatpush1.msra.mxu0 %v130
    %251 = vmatprep.subr.mxu0 0.0
    %252 = vmatpush1.msra.mxu0 %v129
    %253 = vmatprep.subr.mxu0 0.0
    %254 = vmatpush1.msra.mxu0 %v128
    %255 = vmatprep.subr.mxu0 0.0
    %256 = vmatpush1.msra.mxu0 %v127
    %257 = vmatprep.subr.mxu0 0.0
    %258 = vmatpush1.msra.mxu0 %v126
    %259 = vmatprep.subr.mxu0 0.0
    %260 = vmatpush2.msra.mxu0 0.0
    %261 = vmatprep.subr.mxu0 0.0
    %262 = vmatpush2.msra.mxu0 0.0
    %263 = vmatprep.subr.mxu0 0.0
    %264 = vmatpush2.msra.mxu0 0.0
    %265 = vmatprep.subr.mxu0 0.0
    %266 = vmatpush2.msra.mxu0 0.0
    %267 = vmatprep.subr.mxu0 0.0
    %268 = vmatpush2.msra.mxu0 0.0
    %269 = vmatprep.subr.mxu0 0.0
    %270 = vmatpush2.msra.mxu0 0.0
    %271 = vmatprep.subr.mxu0 0.0
    %272 = vmatpush2.msra.mxu0 0.0
    %273 = vmatprep.subr.mxu0 0.0
    %274 = vmatpush2.msra.mxu0 0.0
    %275 = vmatprep.subr.mxu0 0.0
    %276 = vmatpush2.msra.mxu0 0.0
    %277 = vmatprep.subr.mxu0 0.0
    %278 = vmatpush2.msra.mxu0 0.0
    %279 = vmatprep.subr.mxu0 0.0
    %280 = vmatpush2.msra.mxu0 0.0
    %281 = vmatprep.subr.mxu0 0.0
    %282 = vmatpush2.msra.mxu0 0.0
    %283 = vmatprep.subr.mxu0 0.0
    %284 = vmatpush2.msra.mxu0 0.0
    %285 = vmatprep.subr.mxu0 0.0
    %286 = vmatpush2.msra.mxu0 0.0
    %287 = vmatprep.subr.mxu0 0.0
    %288 = vmatpush2.msra.mxu0 0.0
    %289 = vmatprep.subr.mxu0 0.0
    %290 = vmatpush2.msra.mxu0 0.0
    %291 = vmatprep.mubr.f32.mxu0 0.0
    %292 = vmatmul.mubr.f32.gmra.mxu0 %v219
    %v293 = vpop.f32.mrf.mxu0
    %v294 = vadd.f32 %v225, %v293
    %v295 = vpop.f32.mrf.mxu0
    %296 = vdwg.mxu0
    %297 = vst [vmem:[#allocation9] sm:$0xff] %v294
    // Predicated region
    $region50: #{tpu_custom_call.1} parent=1 // pred_check
      _
    $region51: #{tpu_custom_call.1} parent=1 // pred_check_branch
      %299 = sbr.rel (0) target = $region53
    $region52: #{tpu_custom_call.1} parent=1 // pred_region
      %s301 = ssub.s32 128, 128
      %302 = vsyncadd [#allocation5], %s301
      %s304 = sshll.u32 [#allocation9], 4
      %s305 = int_to_ptr.vmem [resolvable:$true] %s304
      %307 = dma.vmem_to_hbm [thread:$0]  %s305, 128, %s9, [#allocation5]
    $region53: #{tpu_custom_call.1} parent=1 // pred_fallthru
      _
    // Predicated region
    $region54: #{tpu_custom_call.1} parent=1 // pred_check
      _
    $region55: #{tpu_custom_call.1} parent=1 // pred_check_branch
      %309 = sbr.rel (0) target = $region57
    $region56: #{tpu_custom_call.1} parent=1 // pred_region
      %310 = dma.done [#allocation5], 128
    $region57: #{tpu_custom_call.1} parent=1 // pred_fallthru
      _
    %311 = vsyncpa [#allocation4], 1
    %312 = vsyncpa [#allocation7], 1
    %313 = vsyncpa [#allocation5], 1

</llo_original>
